<compile_context>
chip_gen: v7x
topology: tpu7x:2x2x1
jax: 0.10.0
libtpu: 0.0.40
codegen_flags: <defaults>
</compile_context>

<pallas_src>
import functools

import jax
import jax.numpy as jnp
from jax.experimental import pallas as pl
from jax.experimental.pallas import tpu as pltpu


def _round_up(v, m):
    return ((v + m - 1) // m) * m


def _ae_kernel(x_ref, w_enc_ref, b_enc_ref, w_dec_ref, b_dec_ref, out_ref, *,
               num_features):
    """Fused encoder/decoder on one batch tile.

    out_ref is a single fused (tm, F + H) block laid out as [recon | latent];
    the wrapper slices the three module outputs from it.
    """
    x = x_ref[...]
    # Encoder: Linear + Tanh.  f32 accumulation on the MXU; bias add + tanh in
    # f32 regardless of I/O dtype (no bf16 VPU/EUP dependence -> v5e-safe).
    latent_f32 = jnp.tanh(
        jnp.dot(x, w_enc_ref[...], preferred_element_type=jnp.float32)
        + b_enc_ref[...].astype(jnp.float32))
    # Cast to the I/O dtype before the decoder matmul (parity with a two-pass
    # module whose activations live in the I/O dtype between the layers).
    latent = latent_f32.astype(out_ref.dtype)

    # Decoder: Linear + Tanh.
    recon = jnp.tanh(
        jnp.dot(latent, w_dec_ref[...], preferred_element_type=jnp.float32)
        + b_dec_ref[...].astype(jnp.float32)).astype(out_ref.dtype)

    # Fused store: whole latent emitted (no in-vreg lane slicing); one output
    # DMA per grid step instead of three.
    out_ref[:, :num_features] = recon
    out_ref[:, num_features:] = latent


def _choose_batch_tile(batch, num_features, hidden_dim, itemsize,
                       vmem_budget_bytes=24 * 1024 * 1024, tm_cap=4096):
    """Largest batch tile whose lane-padded, double-buffered VMEM tiles fit a
    conservative budget (safe under v7x's 32 MiB default scoped VMEM; v5e/v6e
    have more headroom).  Accounts for the fact that every <=128-wide tile
    pads to 128 lanes in VMEM and that sub-32-bit dtypes pack sublanes."""
    sub = max(8, 32 // itemsize)          # 8 (f32) / 16 (bf16) / 32 (int8)
    f_pad = _round_up(num_features, 128)
    h_pad = _round_up(hidden_dim, 128)
    out_pad = _round_up(num_features + hidden_dim, 128)
    # Resident weights/biases (constant index_map); counted double-buffered to
    # stay conservative.
    resident = 2 * itemsize * (
        _round_up(num_features, sub) * h_pad        # W_enc
        + _round_up(hidden_dim, sub) * f_pad        # W_dec
        + sub * (h_pad + f_pad))                    # b_enc, b_dec
    # Per batch-row bytes for the pipelined tiles: x (F) + fused out (F+H),
    # each double-buffered.
    per_row = 2 * itemsize * (f_pad + out_pad)
    avail = max(vmem_budget_bytes - resident, per_row * sub)
    tm = min(batch, avail // per_row, tm_cap)
    tm = max((tm // sub) * sub, sub)      # native sublane-packing multiple
    return tm, sub


def time_domain_ae_forward(x, w_enc, b_enc, w_dec, b_dec,
                           num_time_invariant_features,
                           num_instantaneous_features,
                           *, batch_tile=None):
    """x: (B, F); w_enc: (F, H); b_enc: (1, H); w_dec: (H, F); b_dec: (1, F).
    Weights are stored transposed relative to PyTorch, i.e. (in, out).
    Returns (reconstruction, time_invariant_features, instantaneous_features)."""
    B, F = x.shape
    H = w_enc.shape[1]
    n_ti = num_time_invariant_features
    n_inst = num_instantaneous_features
    assert H == n_ti + n_inst

    itemsize = jnp.dtype(x.dtype).itemsize
    tm, sub = _choose_batch_tile(B, F, H, itemsize)
    if batch_tile is not None:
        tm = batch_tile
    else:
        # Guarantee >=2 grid steps when each half still has >=256 rows so the
        # "parallel" batch axis can shard across v7x's two TensorCores.
        # Negligible cost (~0.35 us extra step) on single-TC v5e/v6e.
        half = _round_up(pl.cdiv(B, 2), sub)
        if half >= 256:
            tm = min(tm, half)

    grid_b = pl.cdiv(B, tm)
    b_pad = grid_b * tm
    x_in = x if b_pad == B else jnp.pad(x, ((0, b_pad - B), (0, 0)))

    kernel = functools.partial(_ae_kernel, num_features=F)

    fused = pl.pallas_call(
        kernel,
        out_shape=jax.ShapeDtypeStruct((b_pad, F + H), x.dtype),  # [recon|latent]
        grid_spec=pltpu.PrefetchScalarGridSpec(
            num_scalar_prefetch=0,
            grid=(grid_b,),
            in_specs=[
                # TODO(synk): switch to pipeline_mode=pl.Buffered(3) only if
                # profiling shows exposed input DMA at the chosen tile size.
                pl.BlockSpec((tm, F), lambda i: (i, 0)),   # x tile (pipelined)
                pl.BlockSpec((F, H), lambda i: (0, 0)),    # W_enc (resident)
                pl.BlockSpec((1, H), lambda i: (0, 0)),    # b_enc (resident)
                pl.BlockSpec((H, F), lambda i: (0, 0)),    # W_dec (resident)
                pl.BlockSpec((1, F), lambda i: (0, 0)),    # b_dec (resident)
            ],
            out_specs=pl.BlockSpec((tm, F + H), lambda i: (i, 0)),
        ),
        compiler_params=pltpu.CompilerParams(
            dimension_semantics=("parallel",),   # megacore-shard batch (v7x)
            # Lane-padded double-buffered accounting in _choose_batch_tile
            # keeps usage under ~28 MiB, so 32 MiB leaves headroom and stays
            # inside v7x's 64 MiB physical / 32 MiB default scoped per-TC VMEM.
            vmem_limit_bytes=32 * 1024 * 1024,
        ),
    )(x_in, w_enc, b_enc, w_dec, b_dec)

    if b_pad != B:
        fused = fused[:B]
    recon = fused[:, :F]
    latent = fused[:, F:]
    time_inv = latent[:, :n_ti]
    inst = latent[:, H - n_inst:]    # == latent[:, -n_inst:]
    return recon, time_inv, inst


def init_params(key, num_features, hidden_dim, dtype=jnp.float32):
    """Deterministic init mimicking nn.Linear's uniform(-1/sqrt(in), 1/sqrt(in)).
    Weights are stored transposed relative to PyTorch: (in, out)."""
    k1, k2, k3, k4 = jax.random.split(key, 4)
    bound_enc = 1.0 / jnp.sqrt(num_features)
    bound_dec = 1.0 / jnp.sqrt(hidden_dim)
    w_enc = jax.random.uniform(k1, (num_features, hidden_dim), dtype,
                               -bound_enc, bound_enc)
    b_enc = jax.random.uniform(k2, (1, hidden_dim), dtype,
                               -bound_enc, bound_enc)
    w_dec = jax.random.uniform(k3, (hidden_dim, num_features), dtype,
                               -bound_dec, bound_dec)
    b_dec = jax.random.uniform(k4, (1, num_features), dtype,
                               -bound_dec, bound_dec)
    return w_enc, b_enc, w_dec, b_dec


if __name__ == "__main__":
    # Small shapes consistent with the module's forward (input is (B, num_features)).
    batch = 128
    num_features = 16
    num_time_invariant_features = 8
    num_instantaneous_features = 24
    hidden_dim = num_time_invariant_features + num_instantaneous_features  # 32

    key = jax.random.PRNGKey(0)
    kx, kp = jax.random.split(key)
    x = jax.random.normal(kx, (batch, num_features), jnp.float32)
    w_enc, b_enc, w_dec, b_dec = init_params(kp, num_features, hidden_dim)

    # --- f32 run, forcing a multi-step batch grid (TM=32 -> 4 grid steps) to
    #     exercise the pipelined x / fused-output tiles + resident weights.
    recon, time_inv, inst = time_domain_ae_forward(
        x, w_enc, b_enc, w_dec, b_dec,
        num_time_invariant_features, num_instantaneous_features,
        batch_tile=32)
    jax.block_until_ready((recon, time_inv, inst))

    # Reference check in plain JAX.
    latent_ref = jnp.tanh(x @ w_enc + b_enc)
    recon_ref = jnp.tanh(latent_ref @ w_dec + b_dec)
    assert recon.shape == (batch, num_features)
    assert time_inv.shape == (batch, num_time_invariant_features)
    assert inst.shape == (batch, num_instantaneous_features)
    assert jnp.allclose(recon, recon_ref, atol=1e-5)
    assert jnp.allclose(time_inv, latent_ref[:, :num_time_invariant_features],
                        atol=1e-5)
    assert jnp.allclose(inst, latent_ref[:, -num_instantaneous_features:],
                        atol=1e-5)

    # --- f32 auto-tiled run (exercises the lane-padding-aware tile chooser).
    recon_a, ti_a, inst_a = time_domain_ae_forward(
        x, w_enc, b_enc, w_dec, b_dec,
        num_time_invariant_features, num_instantaneous_features)
    jax.block_until_ready((recon_a, ti_a, inst_a))
    assert jnp.allclose(recon_a, recon_ref, atol=1e-5)

    # --- bf16 I/O run (halved HBM traffic; f32 MXU accumulation + f32 tanh).
    #     bf16 I/O is the recommended default on HBM-bound v5e/v6e.
    to_bf16 = lambda a: a.astype(jnp.bfloat16)
    recon_bf, ti_bf, inst_bf = time_domain_ae_forward(
        to_bf16(x), to_bf16(w_enc), to_bf16(b_enc),
        to_bf16(w_dec), to_bf16(b_dec),
        num_time_invariant_features, num_instantaneous_features)
    jax.block_until_ready((recon_bf, ti_bf, inst_bf))
    assert jnp.allclose(recon_bf.astype(jnp.float32), recon_ref, atol=5e-2)
    assert jnp.allclose(ti_bf.astype(jnp.float32),
                        latent_ref[:, :num_time_invariant_features], atol=5e-2)
    assert jnp.allclose(inst_bf.astype(jnp.float32),
                        latent_ref[:, -num_instantaneous_features:], atol=5e-2)

    print("KERNEL_OK")
</pallas_src>

<mosaic_0001>
module attributes {stable_mosaic.version = 11 : i64} {
  func.func @_ae_kernel(%arg0: i32, %arg1: memref<32x16xf32, #tpu.memory_space<vmem>>, %arg2: memref<16x32xf32, #tpu.memory_space<vmem>>, %arg3: memref<1x32xf32, #tpu.memory_space<vmem>>, %arg4: memref<32x16xf32, #tpu.memory_space<vmem>>, %arg5: memref<1x16xf32, #tpu.memory_space<vmem>>, %arg6: memref<32x48xf32, #tpu.memory_space<vmem>>) attributes {dimension_semantics = [#tpu.dimension_semantics<parallel>], iteration_bounds = array<i64: 4>, scalar_prefetch = 0 : i64, scratch_operands = 0 : i64, tpu.core_type = #tpu.core_type<tc>, window_params = [{transform_indices = @transform_0, window_bounds = array<i64: 32, 16>}, {pipeline_mode = #tpu.pipeline_mode<synchronous>, transform_indices = @transform_1, window_bounds = array<i64: 16, 32>}, {pipeline_mode = #tpu.pipeline_mode<synchronous>, transform_indices = @transform_2, window_bounds = array<i64: 1, 32>}, {pipeline_mode = #tpu.pipeline_mode<synchronous>, transform_indices = @transform_3, window_bounds = array<i64: 32, 16>}, {pipeline_mode = #tpu.pipeline_mode<synchronous>, transform_indices = @transform_4, window_bounds = array<i64: 1, 16>}, {transform_indices = @transform_5, window_bounds = array<i64: 32, 48>}]} {
    %c0 = arith.constant 0 : index
    %c0_0 = arith.constant 0 : index
    %0 = vector.load %arg1[%c0, %c0_0] : memref<32x16xf32, #tpu.memory_space<vmem>>, vector<32x16xf32>
    %c0_1 = arith.constant 0 : index
    %c0_2 = arith.constant 0 : index
    %1 = vector.load %arg2[%c0_1, %c0_2] : memref<16x32xf32, #tpu.memory_space<vmem>>, vector<16x32xf32>
    %cst = arith.constant dense<0.000000e+00> : vector<32x32xf32>
    %2 = tpu.matmul %0, %1, %cst {dimension_numbers = #tpu.dot_dimension_numbers<[1], [0], [0], [1], [0, 0, 1, 1], [], []>} : vector<32x16xf32>, vector<16x32xf32>, vector<32x32xf32> -> vector<32x32xf32>
    %c0_3 = arith.constant 0 : index
    %c0_4 = arith.constant 0 : index
    %3 = vector.load %arg3[%c0_3, %c0_4] : memref<1x32xf32, #tpu.memory_space<vmem>>, vector<1x32xf32>
    %4 = vector.broadcast %3 : vector<1x32xf32> to vector<32x32xf32>
    %5 = arith.addf %2, %4 : vector<32x32xf32>
    %6 = math.tanh %5 : vector<32x32xf32>
    %c0_5 = arith.constant 0 : index
    %c0_6 = arith.constant 0 : index
    %7 = vector.load %arg4[%c0_5, %c0_6] : memref<32x16xf32, #tpu.memory_space<vmem>>, vector<32x16xf32>
    %cst_7 = arith.constant dense<0.000000e+00> : vector<32x16xf32>
    %8 = tpu.matmul %6, %7, %cst_7 {dimension_numbers = #tpu.dot_dimension_numbers<[1], [0], [0], [1], [0, 0, 1, 1], [], []>} : vector<32x32xf32>, vector<32x16xf32>, vector<32x16xf32> -> vector<32x16xf32>
    %c0_8 = arith.constant 0 : index
    %c0_9 = arith.constant 0 : index
    %9 = vector.load %arg5[%c0_8, %c0_9] : memref<1x16xf32, #tpu.memory_space<vmem>>, vector<1x16xf32>
    %10 = vector.broadcast %9 : vector<1x16xf32> to vector<32x16xf32>
    %11 = arith.addf %8, %10 : vector<32x16xf32>
    %12 = math.tanh %11 : vector<32x16xf32>
    %c0_10 = arith.constant 0 : index
    %c0_11 = arith.constant 0 : index
    %13 = vector.load %arg6[%c0_10, %c0_11] : memref<32x48xf32, #tpu.memory_space<vmem>>, vector<32x16xf32>
    tpu.vector_store %arg6[%c0_10, %c0_11], %12 {strides = array<i32>} : memref<32x48xf32, #tpu.memory_space<vmem>>, vector<32x16xf32>,
    %c0_12 = arith.constant 0 : index
    %c16 = arith.constant 16 : index
    %14 = vector.load %arg6[%c0_12, %c16] : memref<32x48xf32, #tpu.memory_space<vmem>>, vector<32x32xf32>
    tpu.vector_store %arg6[%c0_12, %c16], %6 {strides = array<i32>} : memref<32x48xf32, #tpu.memory_space<vmem>>, vector<32x32xf32>,
    return
  }
  func.func @transform_0(%arg0: i32) -> (i32, i32) {
    %c0_i32 = arith.constant 0 : i32
    %c0_i32_0 = arith.constant 0 : i32
    return %arg0, %c0_i32 : i32, i32
  }
  func.func @transform_1(%arg0: i32) -> (i32, i32) {
    %c0_i32 = arith.constant 0 : i32
    %c0_i32_0 = arith.constant 0 : i32
    %c0_i32_1 = arith.constant 0 : i32
    return %c0_i32, %c0_i32_0 : i32, i32
  }
  func.func @transform_2(%arg0: i32) -> (i32, i32) {
    %c0_i32 = arith.constant 0 : i32
    %c0_i32_0 = arith.constant 0 : i32
    %c0_i32_1 = arith.constant 0 : i32
    return %c0_i32, %c0_i32_0 : i32, i32
  }
  func.func @transform_3(%arg0: i32) -> (i32, i32) {
    %c0_i32 = arith.constant 0 : i32
    %c0_i32_0 = arith.constant 0 : i32
    %c0_i32_1 = arith.constant 0 : i32
    return %c0_i32, %c0_i32_0 : i32, i32
  }
  func.func @transform_4(%arg0: i32) -> (i32, i32) {
    %c0_i32 = arith.constant 0 : i32
    %c0_i32_0 = arith.constant 0 : i32
    %c0_i32_1 = arith.constant 0 : i32
    return %c0_i32, %c0_i32_0 : i32, i32
  }
  func.func @transform_5(%arg0: i32) -> (i32, i32) {
    %c0_i32 = arith.constant 0 : i32
    %c0_i32_0 = arith.constant 0 : i32
    return %arg0, %c0_i32 : i32, i32
  }
}

</mosaic_0001>

<llo_original>
// kernel: tpu_custom_call.1
$region0: #{tpu_custom_call.1}
  #allocation0 [shape = 'u32[]', space=smem, size = 0x4, offset = 0x4, fixed_abs, tag = 'smem constant byte address 0x4 - core index']
  #allocation1 [shape = 'u32[144,128]{1,0:T(1,128)}', space=vmem, size = 0x12000, scoped, tag = 'internal scratch']
  %s0 = inlined_call_operand.vmem [shape: f32[128,16], index: 0, kind: input, shape index: {}]
  %s1 = inlined_call_operand.vmem [shape: f32[16,32], index: 1, kind: input, shape index: {}]
  %s2 = inlined_call_operand.vmem [shape: f32[1,32], index: 2, kind: input, shape index: {}]
  %s3 = inlined_call_operand.vmem [shape: f32[32,16], index: 3, kind: input, shape index: {}]
  %s4 = inlined_call_operand.vmem [shape: f32[1,16], index: 4, kind: input, shape index: {}]
  %s5 = inlined_call_operand.vmem [shape: f32[128,48], index: 5, kind: output, shape index: {}]
  %s6 = sld [smem:[#allocation0]]
  $region53: #{tpu_custom_call.1} parent=0
    _
  %s8 = ssub.s32 1, %s6
  %s9 = scalar_select 0, %s8, %s6
  loop: start=0, step=1, limit=6
  $region2: #{tpu_custom_call.1} parent=0 // loop_pre_header
    _
  $region3: #{tpu_custom_call.1} parent=0 // loop_header
    %s11 = sphi 0, %s15
    %p12 = scmp.ge.s32.totalorder %s11, 6
    %s21 = sphi 0, %s23
    %s24 = sphi 0, %s21
    %s25 = sphi 0, %s24
    %s41 = sphi 0, %s25
    %s45 = sphi 0, %s45
    %s47 = sphi 0, %s45
    %s48 = sphi 0, %s47
    %s62 = sphi 0, %s48
    %s66 = sphi 0, %s66
    %s68 = sphi 0, %s66
    %s69 = sphi 0, %s68
    %s83 = sphi 0, %s69
    %s87 = sphi 0, %s87
    %s89 = sphi 0, %s87
    %s90 = sphi 0, %s89
    %s104 = sphi 0, %s90
    %s108 = sphi 0, %s108
    %s110 = sphi 0, %s108
    %s111 = sphi 0, %s110
    %s125 = sphi 0, %s111
    %s131 = sphi 0, %s133
    %s134 = sphi 0, %s131
    %s135 = sphi 0, %s134
    %s151 = sphi 0, %s135
  $region4: #{tpu_custom_call.1} parent=0 // loop_header_branch
    %14 = sbr.rel (%p12) target = $region8
  $region5: #{tpu_custom_call.1} parent=0 // loop_body
    %s16 = ssub.s32 %s11, 1
    %s17 = ssub.s32 %s11, 2
    %s18 = sadd.s32 %s11, 1
    %s19 = ssub.s32 %s11, %s18
    %p20 = scmp.eq.s32.totalorder %s19, 0
    %s22 = sadd.s32 %s21, 1
    %s23 = scalar_select %p20, %s21, %s22
    %p26 = pneg %p20
    %p27 = scmp.eq.s32.totalorder %s11, 3
    %p28 = por %p26, %p27
    %p29 = scmp.ne.s32.totalorder %s21, %s24
    %p30 = scmp.eq.s32.totalorder %s11, 0
    %p31 = por %p29, %p30
    %p32 = scmp.ne.s32.totalorder %s21, %s24
    %p33 = scmp.eq.s32.totalorder %s16, 3
    %p34 = por %p32, %p33
    %p35 = scmp.ne.s32.totalorder %s24, %s25
    %p36 = scmp.eq.s32.totalorder %s16, 0
    %p37 = por %p35, %p36
    %p38 = scmp.ne.s32.totalorder %s24, %s25
    %p39 = scmp.eq.s32.totalorder %s17, 3
    %p40 = por %p38, %p39
    %p42 = scmp.ne.s32.totalorder %s25, %s41
    %p43 = scmp.eq.s32.totalorder %s17, 0
    %p44 = por %p42, %p43
    %s46 = sadd.s32 %s45, 1
    %p49 = scmp.eq.s32.totalorder %s11, 3
    %p50 = scmp.ne.s32.totalorder %s45, %s47
    %p51 = scmp.eq.s32.totalorder %s11, 0
    %p52 = por %p50, %p51
    %p53 = scmp.ne.s32.totalorder %s45, %s47
    %p54 = scmp.eq.s32.totalorder %s16, 3
    %p55 = por %p53, %p54
    %p56 = scmp.ne.s32.totalorder %s47, %s48
    %p57 = scmp.eq.s32.totalorder %s16, 0
    %p58 = por %p56, %p57
    %p59 = scmp.ne.s32.totalorder %s47, %s48
    %p60 = scmp.eq.s32.totalorder %s17, 3
    %p61 = por %p59, %p60
    %p63 = scmp.ne.s32.totalorder %s48, %s62
    %p64 = scmp.eq.s32.totalorder %s17, 0
    %p65 = por %p63, %p64
    %s67 = sadd.s32 %s66, 1
    %p70 = scmp.eq.s32.totalorder %s11, 3
    %p71 = scmp.ne.s32.totalorder %s66, %s68
    %p72 = scmp.eq.s32.totalorder %s11, 0
    %p73 = por %p71, %p72
    %p74 = scmp.ne.s32.totalorder %s66, %s68
    %p75 = scmp.eq.s32.totalorder %s16, 3
    %p76 = por %p74, %p75
    %p77 = scmp.ne.s32.totalorder %s68, %s69
    %p78 = scmp.eq.s32.totalorder %s16, 0
    %p79 = por %p77, %p78
    %p80 = scmp.ne.s32.totalorder %s68, %s69
    %p81 = scmp.eq.s32.totalorder %s17, 3
    %p82 = por %p80, %p81
    %p84 = scmp.ne.s32.totalorder %s69, %s83
    %p85 = scmp.eq.s32.totalorder %s17, 0
    %p86 = por %p84, %p85
    %s88 = sadd.s32 %s87, 1
    %p91 = scmp.eq.s32.totalorder %s11, 3
    %p92 = scmp.ne.s32.totalorder %s87, %s89
    %p93 = scmp.eq.s32.totalorder %s11, 0
    %p94 = por %p92, %p93
    %p95 = scmp.ne.s32.totalorder %s87, %s89
    %p96 = scmp.eq.s32.totalorder %s16, 3
    %p97 = por %p95, %p96
    %p98 = scmp.ne.s32.totalorder %s89, %s90
    %p99 = scmp.eq.s32.totalorder %s16, 0
    %p100 = por %p98, %p99
    %p101 = scmp.ne.s32.totalorder %s89, %s90
    %p102 = scmp.eq.s32.totalorder %s17, 3
    %p103 = por %p101, %p102
    %p105 = scmp.ne.s32.totalorder %s90, %s104
    %p106 = scmp.eq.s32.totalorder %s17, 0
    %p107 = por %p105, %p106
    %s109 = sadd.s32 %s108, 1
    %p112 = scmp.eq.s32.totalorder %s11, 3
    %p113 = scmp.ne.s32.totalorder %s108, %s110
    %p114 = scmp.eq.s32.totalorder %s11, 0
    %p115 = por %p113, %p114
    %p116 = scmp.ne.s32.totalorder %s108, %s110
    %p117 = scmp.eq.s32.totalorder %s16, 3
    %p118 = por %p116, %p117
    %p119 = scmp.ne.s32.totalorder %s110, %s111
    %p120 = scmp.eq.s32.totalorder %s16, 0
    %p121 = por %p119, %p120
    %p122 = scmp.ne.s32.totalorder %s110, %s111
    %p123 = scmp.eq.s32.totalorder %s17, 3
    %p124 = por %p122, %p123
    %p126 = scmp.ne.s32.totalorder %s111, %s125
    %p127 = scmp.eq.s32.totalorder %s17, 0
    %p128 = por %p126, %p127
    %s129 = ssub.s32 %s11, %s18
    %p130 = scmp.eq.s32.totalorder %s129, 0
    %s132 = sadd.s32 %s131, 1
    %s133 = scalar_select %p130, %s131, %s132
    %p136 = pneg %p130
    %p137 = scmp.eq.s32.totalorder %s11, 3
    %p138 = por %p136, %p137
    %p139 = scmp.ne.s32.totalorder %s131, %s134
    %p140 = scmp.eq.s32.totalorder %s11, 0
    %p141 = por %p139, %p140
    %p142 = scmp.ne.s32.totalorder %s131, %s134
    %p143 = scmp.eq.s32.totalorder %s16, 3
    %p144 = por %p142, %p143
    %p145 = scmp.ne.s32.totalorder %s134, %s135
    %p146 = scmp.eq.s32.totalorder %s16, 0
    %p147 = por %p145, %p146
    %p148 = scmp.ne.s32.totalorder %s134, %s135
    %p149 = scmp.eq.s32.totalorder %s17, 3
    %p150 = por %p148, %p149
    %p152 = scmp.ne.s32.totalorder %s135, %s151
    %p153 = scmp.eq.s32.totalorder %s17, 0
    %p154 = por %p152, %p153
    %p155 = scmp.le.s32.totalorder 1, %s11
    %p156 = scmp.lt.s32.totalorder %s11, 5
    %p157 = pnand %p155, %p156
    %p158 = pneg %p157
    // Predicated region
    $region9: #{tpu_custom_call.1} parent=5 // pred_check
      _
    $region10: #{tpu_custom_call.1} parent=5 // pred_check_branch
      %160 = sbr.rel (%p157) target = $region12
    $region11: #{tpu_custom_call.1} parent=5 // pred_region
      %s161 = ssub.s32 %s11, 1
      // Predicated region
      $region13: #{tpu_custom_call.1} parent=11 // pred_check
        %p162 = pneg %p58
      $region14: #{tpu_custom_call.1} parent=11 // pred_check_branch
        %164 = sbr.rel (%p162) target = $region16
      $region15: #{tpu_custom_call.1} parent=11 // pred_region
        _
      $region16: #{tpu_custom_call.1} parent=11 // pred_fallthru
        _
      // Predicated region
      $region17: #{tpu_custom_call.1} parent=11 // pred_check
        %p165 = pneg %p79
      $region18: #{tpu_custom_call.1} parent=11 // pred_check_branch
        %167 = sbr.rel (%p165) target = $region20
      $region19: #{tpu_custom_call.1} parent=11 // pred_region
        _
      $region20: #{tpu_custom_call.1} parent=11 // pred_fallthru
        _
      // Predicated region
      $region21: #{tpu_custom_call.1} parent=11 // pred_check
        %p168 = pneg %p100
      $region22: #{tpu_custom_call.1} parent=11 // pred_check_branch
        %170 = sbr.rel (%p168) target = $region24
      $region23: #{tpu_custom_call.1} parent=11 // pred_region
        _
      $region24: #{tpu_custom_call.1} parent=11 // pred_fallthru
        _
      // Predicated region
      $region25: #{tpu_custom_call.1} parent=11 // pred_check
        %p171 = pneg %p121
      $region26: #{tpu_custom_call.1} parent=11 // pred_check_branch
        %173 = sbr.rel (%p171) target = $region28
      $region27: #{tpu_custom_call.1} parent=11 // pred_region
        _
      $region28: #{tpu_custom_call.1} parent=11 // pred_fallthru
        _
    $region12: #{tpu_custom_call.1} parent=5 // pred_fallthru
      _
    %p174 = scmp.lt.s32.totalorder %s11, 4
    // Predicated region
    $region29: #{tpu_custom_call.1} parent=5 // pred_check
      %p175 = pneg %p174
    $region30: #{tpu_custom_call.1} parent=5 // pred_check_branch
      %177 = sbr.rel (%p175) target = $region32
    $region31: #{tpu_custom_call.1} parent=5 // pred_region
      // Predicated region
      $region33: #{tpu_custom_call.1} parent=31 // pred_check
        %p178 = pneg %p31
      $region34: #{tpu_custom_call.1} parent=31 // pred_check_branch
        %180 = sbr.rel (%p178) target = $region36
      $region35: #{tpu_custom_call.1} parent=31 // pred_region
        %s181 = smul.u32 4, %s11
        %p182 = scmp.lt.s32.totalorder %s181, 15
        %s183 = scalar_select %p182, %s181, 15
        %s184 = smul.addr %s183, 8
        %s185 = scalar_lea.vmem %s0, %s184
        %s186 = smul.u32 4, %s11
      $region36: #{tpu_custom_call.1} parent=31 // pred_fallthru
        _
    $region32: #{tpu_custom_call.1} parent=5 // pred_fallthru
      _
    %p187 = scmp.le.s32.totalorder 1, %s11
    %p188 = scmp.lt.s32.totalorder %s11, 5
    %p189 = pnand %p187, %p188
    %p190 = pneg %p189
    // Predicated region
    $region37: #{tpu_custom_call.1} parent=5 // pred_check
      _
    $region38: #{tpu_custom_call.1} parent=5 // pred_check_branch
      %192 = sbr.rel (%p189) target = $region40
    $region39: #{tpu_custom_call.1} parent=5 // pred_region
      %s193 = ssub.s32 %s11, 1
      %s194 = smul.u32 4, %s16
      %p195 = scmp.lt.s32.totalorder %s194, 15
      %s196 = scalar_select %p195, %s194, 15
      %s197 = smul.addr %s196, 8
      %s198 = scalar_lea.vmem %s0, %s197
      %p199 = pneg %p37
      %p200 = pneg %p34
      %p201 = pneg %p58
      %p202 = pneg %p55
      %p203 = pneg %p79
      %p204 = pneg %p76
      %p205 = pneg %p100
      %p206 = pneg %p97
      %p207 = pneg %p121
      %p208 = pneg %p118
      %p209 = pneg %p147
      %p210 = pneg %p144
      %s211 = smul.u32 4, %s16
      %p212 = scmp.lt.s32.totalorder %s211, 15
      %s213 = scalar_select %p212, %s211, 15
      %s214 = smul.addr %s213, 8
      %s215 = scalar_lea.vmem %s5, %s214
      %s216 = smul.u32 4, %s16
      %p217 = scmp.lt.s32.totalorder %s216, 15
      %s218 = scalar_select %p217, %s216, 15
      %s219 = smul.addr %s218, 8
      %s220 = scalar_lea.vmem %s0, %s219
      %s221 = smul.u32 4, %s16
      %s222 = smul.u32 4, %s16
      %p223 = scmp.lt.s32.totalorder %s222, 15
      %s224 = scalar_select %p223, %s222, 15
      %s225 = smul.addr %s224, 8
      %s226 = scalar_lea.vmem %s5, %s225
      %s227 = smul.u32 4, %s16
      %v228 = vld [vmem:[%s220] sm:$0xff]
      %v229 = vld [vmem:[%s220 + $0x8] sm:$0xff]
      %v230 = vld [vmem:[%s220 + $0x10] sm:$0xff]
      %v231 = vld [vmem:[%s220 + $0x18] sm:$0xff]
      %v232 = vld [vmem:[%s1] sm:$0xff]
      %v233 = vld [vmem:[%s1 + $0x8] sm:$0xff]
      %v234 = vld [vmem:[%s2] sm:$0x1]
      %v236 = vlaneseq
      %v237 = vshrl.u32 %v236, 7
      %v238 = vsub.s32 0, %v237
      %v239 = vrot.slane %v234, %v238
      %vm241 = vcmask 130048
      %v243 = vsel %vm241, %v228, 0
      %v246 = vsel %vm241, %v229, 0
      %v249 = vsel %vm241, %v230, 0
      %v252 = vsel %vm241, %v231, 0
      %254 = vmatprep.subr.mxu0 0.0
      %255 = vmatpush1.msra.mxu0 %v232
      %256 = vmatprep.subr.mxu0 0.0
      %257 = vmatpush1.msra.mxu0 %v233
      %258 = vmatprep.subr.mxu0 0.0
      %259 = vmatpush1.msra.mxu0 0.0
      %260 = vmatprep.subr.mxu0 0.0
      %261 = vmatpush1.msra.mxu0 0.0
      %262 = vmatprep.subr.mxu0 0.0
      %263 = vmatpush1.msra.mxu0 0.0
      %264 = vmatprep.subr.mxu0 0.0
      %265 = vmatpush1.msra.mxu0 0.0
      %266 = vmatprep.subr.mxu0 0.0
      %267 = vmatpush1.msra.mxu0 0.0
      %268 = vmatprep.subr.mxu0 0.0
      %269 = vmatpush1.msra.mxu0 0.0
      %270 = vmatprep.subr.mxu0 0.0
      %271 = vmatpush1.msra.mxu0 0.0
      %272 = vmatprep.subr.mxu0 0.0
      %273 = vmatpush1.msra.mxu0 0.0
      %274 = vmatprep.subr.mxu0 0.0
      %275 = vmatpush1.msra.mxu0 0.0
      %276 = vmatprep.subr.mxu0 0.0
      %277 = vmatpush1.msra.mxu0 0.0
      %278 = vmatprep.subr.mxu0 0.0
      %279 = vmatpush1.msra.mxu0 0.0
      %280 = vmatprep.subr.mxu0 0.0
      %281 = vmatpush1.msra.mxu0 0.0
      %282 = vmatprep.subr.mxu0 0.0
      %283 = vmatpush1.msra.mxu0 0.0
      %284 = vmatprep.subr.mxu0 0.0
      %285 = vmatpush1.msra.mxu0 0.0
      %286 = vmatprep.subr.mxu0 0.0
      %287 = vmatpush1.msra.mxu0 0.0
      %288 = vmatprep.subr.mxu0 0.0
      %289 = vmatpush1.msra.mxu0 0.0
      %290 = vmatprep.subr.mxu0 0.0
      %291 = vmatpush1.msra.mxu0 0.0
      %292 = vmatprep.subr.mxu0 0.0
      %293 = vmatpush1.msra.mxu0 0.0
      %294 = vmatprep.subr.mxu0 0.0
      %295 = vmatpush1.msra.mxu0 0.0
      %296 = vmatprep.subr.mxu0 0.0
      %297 = vmatpush1.msra.mxu0 0.0
      %298 = vmatprep.subr.mxu0 0.0
      %299 = vmatpush1.msra.mxu0 0.0
      %300 = vmatprep.subr.mxu0 0.0
      %301 = vmatpush1.msra.mxu0 0.0
      %302 = vmatprep.subr.mxu0 0.0
      %303 = vmatpush1.msra.mxu0 0.0
      %304 = vmatprep.subr.mxu0 0.0
      %305 = vmatpush1.msra.mxu0 0.0
      %306 = vmatprep.subr.mxu0 0.0
      %307 = vmatpush1.msra.mxu0 0.0
      %308 = vmatprep.subr.mxu0 0.0
      %309 = vmatpush1.msra.mxu0 0.0
      %310 = vmatprep.subr.mxu0 0.0
      %311 = vmatpush1.msra.mxu0 0.0
      %312 = vmatprep.subr.mxu0 0.0
      %313 = vmatpush1.msra.mxu0 0.0
      %314 = vmatprep.subr.mxu0 0.0
      %315 = vmatpush1.msra.mxu0 0.0
      %316 = vmatprep.subr.mxu0 0.0
      %317 = vmatpush1.msra.mxu0 0.0
      %318 = vmatprep.mubr.f32.mxu0 0.0
      %319 = vmatmul.mubr.f32.gmra.mrb[0].mxu0 %v243
      %v320 = vpop.f32.mrb[0].mxu0
      %v321 = vadd.f32 %v239, %v320
      %v322 = vpop.f32.mrb[0].mxu0
      %323 = vmatprep.mubr.f32.mxu0 0.0
      %324 = vmatmul.mubr.f32.gmra.mrb[0].mxu0 %v246
      %v325 = vpop.f32.mrb[0].mxu0
      %v326 = vadd.f32 %v239, %v325
      %v327 = vpop.f32.mrb[0].mxu0
      %328 = vmatprep.mubr.f32.mxu0 0.0
      %329 = vmatmul.mubr.f32.gmra.mrb[0].mxu0 %v249
      %v330 = vpop.f32.mrb[0].mxu0
      %v331 = vadd.f32 %v239, %v330
      %v332 = vpop.f32.mrb[0].mxu0
      %333 = vmatprep.mubr.f32.mxu0 0.0
      %334 = vmatmul.mubr.f32.gmra.mrb[0].mxu0 %v252
      %v335 = vpop.f32.mrb[0].mxu0
      %v336 = vadd.f32 %v239, %v335
      %v337 = vpop.f32.mrb[0].mxu0
      %338 = vdwg.mxu0
      %v339 = vtanh.pop %v321
      %v340 = vtanh.pop %v326
      %v341 = vtanh.pop %v331
      %v342 = vtanh.pop %v336
      %v343 = vld [vmem:[%s3] sm:$0xff]
      %v344 = vld [vmem:[%s3 + $0x8] sm:$0xff]
      %v345 = vld [vmem:[%s3 + $0x10] sm:$0xff]
      %v346 = vld [vmem:[%s3 + $0x18] sm:$0xff]
      %v347 = vld [vmem:[%s4] sm:$0x1]
      %v349 = vlaneseq
      %v350 = vshrl.u32 %v349, 7
      %v351 = vsub.s32 0, %v350
      %v352 = vrot.slane %v347, %v351
      %vm354 = vcmask 261120
      %v356 = vsel %vm354, %v339, 0
      %v359 = vsel %vm354, %v340, 0
      %v362 = vsel %vm354, %v341, 0
      %v365 = vsel %vm354, %v342, 0
      %367 = vmatprep.subr.mxu0 0.0
      %368 = vmatpush1.msra.mxu0 %v343
      %369 = vmatprep.subr.mxu0 0.0
      %370 = vmatpush1.msra.mxu0 %v344
      %371 = vmatprep.subr.mxu0 0.0
      %372 = vmatpush1.msra.mxu0 %v345
      %373 = vmatprep.subr.mxu0 0.0
      %374 = vmatpush1.msra.mxu0 %v346
      %375 = vmatprep.subr.mxu0 0.0
      %376 = vmatpush1.msra.mxu0 0.0
      %377 = vmatprep.subr.mxu0 0.0
      %378 = vmatpush1.msra.mxu0 0.0
      %379 = vmatprep.subr.mxu0 0.0
      %380 = vmatpush1.msra.mxu0 0.0
      %381 = vmatprep.subr.mxu0 0.0
      %382 = vmatpush1.msra.mxu0 0.0
      %383 = vmatprep.subr.mxu0 0.0
      %384 = vmatpush1.msra.mxu0 0.0
      %385 = vmatprep.subr.mxu0 0.0
      %386 = vmatpush1.msra.mxu0 0.0
      %387 = vmatprep.subr.mxu0 0.0
      %388 = vmatpush1.msra.mxu0 0.0
      %389 = vmatprep.subr.mxu0 0.0
      %390 = vmatpush1.msra.mxu0 0.0
      %391 = vmatprep.subr.mxu0 0.0
      %392 = vmatpush1.msra.mxu0 0.0
      %393 = vmatprep.subr.mxu0 0.0
      %394 = vmatpush1.msra.mxu0 0.0
      %395 = vmatprep.subr.mxu0 0.0
      %396 = vmatpush1.msra.mxu0 0.0
      %397 = vmatprep.subr.mxu0 0.0
      %398 = vmatpush1.msra.mxu0 0.0
      %399 = vmatprep.subr.mxu0 0.0
      %400 = vmatpush1.msra.mxu0 0.0
      %401 = vmatprep.subr.mxu0 0.0
      %402 = vmatpush1.msra.mxu0 0.0
      %403 = vmatprep.subr.mxu0 0.0
      %404 = vmatpush1.msra.mxu0 0.0
      %405 = vmatprep.subr.mxu0 0.0
      %406 = vmatpush1.msra.mxu0 0.0
      %407 = vmatprep.subr.mxu0 0.0
      %408 = vmatpush1.msra.mxu0 0.0
      %409 = vmatprep.subr.mxu0 0.0
      %410 = vmatpush1.msra.mxu0 0.0
      %411 = vmatprep.subr.mxu0 0.0
      %412 = vmatpush1.msra.mxu0 0.0
      %413 = vmatprep.subr.mxu0 0.0
      %414 = vmatpush1.msra.mxu0 0.0
      %415 = vmatprep.subr.mxu0 0.0
      %416 = vmatpush1.msra.mxu0 0.0
      %417 = vmatprep.subr.mxu0 0.0
      %418 = vmatpush1.msra.mxu0 0.0
      %419 = vmatprep.subr.mxu0 0.0
      %420 = vmatpush1.msra.mxu0 0.0
      %421 = vmatprep.subr.mxu0 0.0
      %422 = vmatpush1.msra.mxu0 0.0
      %423 = vmatprep.subr.mxu0 0.0
      %424 = vmatpush1.msra.mxu0 0.0
      %425 = vmatprep.subr.mxu0 0.0
      %426 = vmatpush1.msra.mxu0 0.0
      %427 = vmatprep.subr.mxu0 0.0
      %428 = vmatpush1.msra.mxu0 0.0
      %429 = vmatprep.subr.mxu0 0.0
      %430 = vmatpush1.msra.mxu0 0.0
      %431 = vmatprep.mubr.f32.mxu0 0.0
      %432 = vmatmul.mubr.f32.gmra.mrb[0].mxu0 %v356
      %v433 = vpop.f32.mrb[0].mxu0
      %v434 = vadd.f32 %v352, %v433
      %v435 = vpop.f32.mrb[0].mxu0
      %436 = vmatprep.mubr.f32.mxu0 0.0
      %437 = vmatmul.mubr.f32.gmra.mrb[0].mxu0 %v359
      %v438 = vpop.f32.mrb[0].mxu0
      %v439 = vadd.f32 %v352, %v438
      %v440 = vpop.f32.mrb[0].mxu0
      %441 = vmatprep.mubr.f32.mxu0 0.0
      %442 = vmatmul.mubr.f32.gmra.mrb[0].mxu0 %v362
      %v443 = vpop.f32.mrb[0].mxu0
      %v444 = vadd.f32 %v352, %v443
      %v445 = vpop.f32.mrb[0].mxu0
      %446 = vmatprep.mubr.f32.mxu0 0.0
      %447 = vmatmul.mubr.f32.gmra.mrb[0].mxu0 %v365
      %v448 = vpop.f32.mrb[0].mxu0
      %v449 = vadd.f32 %v352, %v448
      %v450 = vpop.f32.mrb[0].mxu0
      %451 = vdwg.mxu0
      %v452 = vtanh.pop %v434
      %v453 = vtanh.pop %v439
      %v454 = vtanh.pop %v444
      %v455 = vtanh.pop %v449
      %456 = vst.msk [vmem:[%s226] sm:$0xff] %vm241, %v452
      %457 = vst.msk [vmem:[%s226 + $0x8] sm:$0xff] %vm241, %v453
      %458 = vst.msk [vmem:[%s226 + $0x10] sm:$0xff] %vm241, %v454
      %459 = vst.msk [vmem:[%s226 + $0x18] sm:$0xff] %vm241, %v455
      %460 = vrot.lane.b32.xlu0 %v339, 16
      %v461 = vpop.permute.xlu0 %460
      %462 = vrot.lane.b32.xlu0 %v340, 16
      %v463 = vpop.permute.xlu0 %462
      %464 = vrot.lane.b32.xlu0 %v341, 16
      %v465 = vpop.permute.xlu0 %464
      %466 = vrot.lane.b32.xlu0 %v342, 16
      %v467 = vpop.permute.xlu0 %466
      %vm472 = vcmask 392320
      %473 = vst.msk [vmem:[%s226] sm:$0xff] %vm472, %v461
      %474 = vst.msk [vmem:[%s226 + $0x8] sm:$0xff] %vm472, %v463
      %475 = vst.msk [vmem:[%s226 + $0x10] sm:$0xff] %vm472, %v465
      %476 = vst.msk [vmem:[%s226 + $0x18] sm:$0xff] %vm472, %v467
      %s477 = smul.u32 4, %s16
      %p478 = scmp.lt.s32.totalorder %s477, 15
      %s479 = scalar_select %p478, %s477, 15
      %s480 = smul.addr %s479, 8
      %s481 = scalar_lea.vmem %s5, %s480
      // Predicated region
      $region41: #{tpu_custom_call.1} parent=39 // pred_check
        %p482 = pneg %p144
      $region42: #{tpu_custom_call.1} parent=39 // pred_check_branch
        %484 = sbr.rel (%p482) target = $region44
      $region43: #{tpu_custom_call.1} parent=39 // pred_region
        %s485 = smul.u32 4, %s16
      $region44: #{tpu_custom_call.1} parent=39 // pred_fallthru
        _
    $region40: #{tpu_custom_call.1} parent=5 // pred_fallthru
      _
    %p486 = scmp.le.s32.totalorder 2, %s11
    // Predicated region
    $region45: #{tpu_custom_call.1} parent=5 // pred_check
      %p487 = pneg %p486
    $region46: #{tpu_custom_call.1} parent=5 // pred_check_branch
      %489 = sbr.rel (%p487) target = $region48
    $region47: #{tpu_custom_call.1} parent=5 // pred_region
      %s490 = ssub.s32 %s11, 2
      // Predicated region
      $region49: #{tpu_custom_call.1} parent=47 // pred_check
        %p491 = pneg %p150
      $region50: #{tpu_custom_call.1} parent=47 // pred_check_branch
        %493 = sbr.rel (%p491) target = $region52
      $region51: #{tpu_custom_call.1} parent=47 // pred_region
        %s494 = smul.u32 4, %s17
        %p495 = scmp.lt.s32.totalorder %s494, 15
        %s496 = scalar_select %p495, %s494, 15
        %s497 = smul.addr %s496, 8
        %s498 = scalar_lea.vmem %s5, %s497
      $region52: #{tpu_custom_call.1} parent=47 // pred_fallthru
        _
    $region48: #{tpu_custom_call.1} parent=5 // pred_fallthru
      _
  $region6: #{tpu_custom_call.1} parent=0 // loop_footer
    %s15 = sadd.s32 1, %s11
  $region7: #{tpu_custom_call.1} parent=0 // loop_footer_branch
    %10 = sbr.rel target = $region3
  $region8: #{tpu_custom_call.1} parent=0 // loop_exit
    _

</llo_original>
